<compile_context>
chip_gen: v7x
topology: tpu7x:2x2x1
jax: 0.10.0
libtpu: 0.0.40
codegen_flags: <defaults>
</compile_context>

<pallas_src>
import jax
import jax.numpy as jnp
from jax import lax
from jax.experimental import pallas as pl
from jax.experimental.pallas import tpu as pltpu


def _round_up(x: int, m: int) -> int:
    return ((x + m - 1) // m) * m


def _linear_rows_kernel(x_ref, w_ref, o_ref):
    # x_ref: (TR, K) streamed row tile; w_ref: (K, N) VMEM-resident weights;
    # o_ref: (TR, N).  Contract the LHS's *last* dim (MXU-natural orientation,
    # no transpose of the big streamed tile).
    o_ref[...] = lax.dot_general(
        x_ref[...], w_ref[...],
        dimension_numbers=(((1,), (0,)), ((), ())),
        preferred_element_type=jnp.float32,
    ).astype(o_ref.dtype)


def _choose_row_tile(n_rows, row_hbm_bytes, in_row_vmem, out_row_vmem,
                     stream_budget):
    """Rows per grid step: target ~8 MiB of streamed HBM, capped by VMEM."""
    target_tile_bytes = 8 << 20
    tr_target = max(256, target_tile_bytes // max(row_hbm_bytes, 1))
    # Account for up to 3 input buffers (Buffered(3)) + 2 output buffers.
    denom = 3 * in_row_vmem + 2 * out_row_vmem
    tr_vmem = stream_budget // max(denom, 1)
    tr = max(8, min(tr_target, tr_vmem))
    tr = (tr // 8) * 8
    if tr >= n_rows:
        tr = n_rows                      # single full block (always legal)
        if n_rows >= 16:
            # Keep >=2 tiles so v7x megacore can split work across both TCs
            # and the DMA pipeline has something to overlap.
            tr = _round_up(pl.cdiv(n_rows, 2), 8)
    return tr


def _tiled_row_linear(x, rhs, vmem_cap):
    """out = x @ rhs, rows of x streamed through VMEM; rhs stays resident."""
    n_rows, k = x.shape
    n = rhs.shape[1]
    esize = x.dtype.itemsize

    # Lane-padding-aware VMEM accounting (last dim pads to 128 lanes).
    k_pad = max(_round_up(k, 128), 128)
    n_pad = max(_round_up(n, 128), 128)
    in_row_vmem = k_pad * esize
    out_row_vmem = n_pad * esize
    rhs_vmem = _round_up(k, 8) * n_pad * esize

    vmem_budget = (vmem_cap * 5) // 8            # headroom for Pallas internals
    stream_budget = max(vmem_budget - 2 * rhs_vmem, 1 << 20)

    tr = _choose_row_tile(n_rows, k * esize, in_row_vmem, out_row_vmem,
                          stream_budget)
    num_tiles = pl.cdiv(n_rows, tr)

    # Deeper buffering only helps when per-tile transfers stay small.
    tile_hbm_bytes = tr * k * esize
    use_buf3 = tile_hbm_bytes < (1 << 20) and num_tiles >= 4
    x_spec_kwargs = {"pipeline_mode": pl.Buffered(3)} if use_buf3 else {}
    n_in_bufs = 3 if use_buf3 else 2

    footprint = (n_in_bufs * _round_up(tr, 8) * in_row_vmem
                 + 2 * _round_up(tr, 8) * out_row_vmem
                 + 2 * rhs_vmem)
    vmem_limit = int(min(vmem_cap, max(footprint + (2 << 20), 16 << 20)))

    cost = pl.CostEstimate(
        flops=2 * n_rows * k * n,
        transcendentals=0,
        bytes_accessed=esize * (n_rows * k + k * n) + esize * n_rows * n,
    )

    return pl.pallas_call(
        _linear_rows_kernel,
        out_shape=jax.ShapeDtypeStruct((n_rows, n), x.dtype),
        grid_spec=pltpu.PrefetchScalarGridSpec(
            num_scalar_prefetch=0,
            grid=(num_tiles,),
            in_specs=[
                # Streamed row tile; ragged last tile handled by Pallas.
                pl.BlockSpec((tr, k), lambda i: (i, 0), **x_spec_kwargs),
                # Weights: constant block index -> DMA'd once, VMEM-resident.
                pl.BlockSpec((k, n), lambda i: (0, 0)),
            ],
            out_specs=pl.BlockSpec((tr, n), lambda i: (i, 0)),
        ),
        compiler_params=pltpu.CompilerParams(
            dimension_semantics=("parallel",),
            vmem_limit_bytes=vmem_limit,
        ),
        cost_estimate=cost,
    )(x, rhs)


@jax.jit
def static_coefficient_model(scores: jax.Array, weight: jax.Array) -> jax.Array:
    """Forward of StaticCoefficientModel: (batch, M) @ (1, M).T -> (batch, 1)."""
    batch, num_mods = scores.shape
    assert weight.shape == (1, num_mods)
    dtype = scores.dtype

    try:
        vmem_cap = int(pltpu.get_tpu_info().vmem_capacity_bytes)
    except Exception:  # conservative fallback (safe on v5e/v6e/v7x)
        vmem_cap = 64 << 20

    w = weight.astype(dtype)
    lane = 128

    packable = (0 < num_mods < lane and lane % num_mods == 0
                and (batch * num_mods) % lane == 0
                and batch * num_mods >= lane)

    if packable:
        # Lane-dense path: view scores as (batch*M/128, 128) (free row-major
        # reshape) and fold both the weights and the "reduce groups of M lanes"
        # step into one (128, 128/M) matrix -> a single MXU matmul per tile.
        g = lane // num_mods
        packed = scores.reshape((batch * num_mods) // lane, lane)
        w_lane = jnp.tile(w.reshape(-1), g)                          # (128,)
        sel = (jnp.arange(lane)[:, None] // num_mods
               ) == jnp.arange(g)[None, :]                           # (128, g)
        rhs = jnp.where(sel, w_lane[:, None], jnp.zeros((), dtype)).astype(dtype)
        out = _tiled_row_linear(packed, rhs, vmem_cap)               # (R, g)
        return out.reshape(batch, 1)                                 # free reshape

    # General path (M >= 128, or batch*M not a lane multiple): plain row-tiled
    # matmul against the (M, 1) weight column.  Output stores are tiny.
    rhs = w.T                                                        # (M, 1)
    return _tiled_row_linear(scores, rhs, vmem_cap)                  # (batch, 1)


if __name__ == "__main__":
    key = jax.random.PRNGKey(0)
    k1, k2, k3, kw1, kw2 = jax.random.split(key, 5)

    # Integer-valued f32 inputs make results exact under any MXU precision
    # path, so the layout/reduction logic is checked bit-tight.
    cases = [
        # (name, scores) -- small M + aligned batch -> lane-dense packed path
        ("packed", jax.random.randint(k1, (512, 4), -8, 8).astype(jnp.float32)),
        # small M + ragged batch -> general fallback path + ragged last tile
        ("ragged", jax.random.randint(k2, (300, 4), -8, 8).astype(jnp.float32)),
        # wide M -> MXU-natural contraction path
        ("wide", jax.random.randint(k3, (64, 256), -8, 8).astype(jnp.float32)),
    ]

    for name, s in cases:
        m = s.shape[1]
        w_ones = jnp.ones((1, m), dtype=jnp.float32)   # module init value
        w_rand = jax.random.randint(kw1, (1, m), -4, 4).astype(jnp.float32)
        for w in (w_ones, w_rand):
            out = jax.block_until_ready(static_coefficient_model(s, w))
            ref = s @ w.T
            assert out.shape == (s.shape[0], 1), (name, out.shape)
            assert jnp.allclose(out, ref, atol=1e-5, rtol=1e-5), name

    # One float-valued sanity check on the packed path (looser tolerance).
    s = jax.random.normal(kw2, (512, 4), dtype=jnp.float32)
    w = jnp.ones((1, 4), dtype=jnp.float32)
    out = jax.block_until_ready(static_coefficient_model(s, w))
    assert jnp.allclose(out, s @ w.T, atol=1e-2, rtol=1e-2)

    print("KERNEL_OK")
</pallas_src>

<mosaic_0001>
module attributes {stable_mosaic.version = 11 : i64} {
  func.func @_linear_rows_kernel(%arg0: i32, %arg1: memref<8x128xf32, #tpu.memory_space<vmem>>, %arg2: memref<128x32xf32, #tpu.memory_space<vmem>>, %arg3: memref<8x32xf32, #tpu.memory_space<vmem>>) attributes {dimension_semantics = [#tpu.dimension_semantics<parallel>], iteration_bounds = array<i64: 2>, scalar_prefetch = 0 : i64, scratch_operands = 0 : i64, tpu.core_type = #tpu.core_type<tc>, window_params = [{transform_indices = @transform_0, window_bounds = array<i64: 8, 128>}, {pipeline_mode = #tpu.pipeline_mode<synchronous>, transform_indices = @transform_1, window_bounds = array<i64: 128, 32>}, {transform_indices = @transform_2, window_bounds = array<i64: 8, 32>}]} {
    %c0 = arith.constant 0 : index
    %c0_0 = arith.constant 0 : index
    %0 = vector.load %arg1[%c0, %c0_0] : memref<8x128xf32, #tpu.memory_space<vmem>>, vector<8x128xf32>
    %c0_1 = arith.constant 0 : index
    %c0_2 = arith.constant 0 : index
    %1 = vector.load %arg2[%c0_1, %c0_2] : memref<128x32xf32, #tpu.memory_space<vmem>>, vector<128x32xf32>
    %cst = arith.constant dense<0.000000e+00> : vector<8x32xf32>
    %2 = tpu.matmul %0, %1, %cst {dimension_numbers = #tpu.dot_dimension_numbers<[1], [0], [0], [1], [0, 0, 1, 1], [], []>} : vector<8x128xf32>, vector<128x32xf32>, vector<8x32xf32> -> vector<8x32xf32>
    %c0_3 = arith.constant 0 : index
    %c0_4 = arith.constant 0 : index
    %3 = vector.load %arg3[%c0_3, %c0_4] : memref<8x32xf32, #tpu.memory_space<vmem>>, vector<8x32xf32>
    tpu.vector_store %arg3[%c0_3, %c0_4], %2 {strides = array<i32>} : memref<8x32xf32, #tpu.memory_space<vmem>>, vector<8x32xf32>,
    return
  }
  func.func @transform_0(%arg0: i32) -> (i32, i32) {
    %c0_i32 = arith.constant 0 : i32
    %c0_i32_0 = arith.constant 0 : i32
    return %arg0, %c0_i32 : i32, i32
  }
  func.func @transform_1(%arg0: i32) -> (i32, i32) {
    %c0_i32 = arith.constant 0 : i32
    %c0_i32_0 = arith.constant 0 : i32
    %c0_i32_1 = arith.constant 0 : i32
    return %c0_i32, %c0_i32_0 : i32, i32
  }
  func.func @transform_2(%arg0: i32) -> (i32, i32) {
    %c0_i32 = arith.constant 0 : i32
    %c0_i32_0 = arith.constant 0 : i32
    return %arg0, %c0_i32 : i32, i32
  }
}

</mosaic_0001>

<llo_original>
// kernel: tile.6
$region0: #{tile.6}
  #allocation0 [shape = 's32[1]{0}', space=sflag, size = 0x4, scoped, tag = 'scoped memory for tile.6']
  %s0 = inlined_call_operand.vmem [shape: f32[4], index: 0, kind: input, shape index: {}]
  %s1 = inlined_call_operand.vmem [shape: f32[32,4], index: 1, kind: output, shape index: {}]
  // Predicated region
  $region2: #{tile.6} parent=0 // pred_check
    _
  $region3: #{tile.6} parent=0 // pred_check_branch
    %3 = sbr.rel (0) target = $region5
  $region4: #{tile.6} parent=0 // pred_region
    _
  $region5: #{tile.6} parent=0 // pred_fallthru
    _
  %v4 = vld [vmem:[%s0] ss:$0 sm:$0xff]
  %5 = vst [vmem:[%s1] sm:$0xff] %v4
  %s6 = scalar_lea.vmem %s1, 8
  %7 = vst [vmem:[%s6] sm:$0xff] %v4
  %s8 = scalar_lea.vmem %s1, 16
  %9 = vst [vmem:[%s8] sm:$0xff] %v4
  %s10 = scalar_lea.vmem %s1, 24
  %11 = vst [vmem:[%s10] sm:$0xff] %v4

// kernel: static_coefficient_model.1
$region0: #{static_coefficient_model.1}
  #allocation0 [shape = 'u32[]', space=smem, size = 0x4, offset = 0x4, fixed_abs, tag = 'smem constant byte address 0x4 - core index']
  #allocation1 [shape = 'u32[144,128]{1,0:T(1,128)}', space=vmem, size = 0x12000, scoped, tag = 'internal scratch']
  %s0 = inlined_call_operand.vmem [shape: f32[16,128], index: 0, kind: input, shape index: {}]
  %s1 = inlined_call_operand.vmem [shape: f32[128,32], index: 1, kind: input, shape index: {}]
  %s2 = inlined_call_operand.vmem [shape: f32[16,32], index: 2, kind: output, shape index: {}]
  %s3 = sld [smem:[#allocation0]]
  $region41: #{static_coefficient_model.1} parent=0
    _
  %s5 = ssub.s32 1, %s3
  %s6 = scalar_select 0, %s5, %s3
  loop: start=0, step=1, limit=4
  $region2: #{static_coefficient_model.1} parent=0 // loop_pre_header
    _
  $region3: #{static_coefficient_model.1} parent=0 // loop_header
    %s8 = sphi 0, %s12
    %p9 = scmp.ge.s32.totalorder %s8, 4
    %s18 = sphi 0, %s20
    %s21 = sphi 0, %s18
    %s22 = sphi 0, %s21
    %s38 = sphi 0, %s22
    %s42 = sphi 0, %s42
    %s44 = sphi 0, %s42
    %s45 = sphi 0, %s44
    %s59 = sphi 0, %s45
    %s65 = sphi 0, %s67
    %s68 = sphi 0, %s65
    %s69 = sphi 0, %s68
    %s85 = sphi 0, %s69
  $region4: #{static_coefficient_model.1} parent=0 // loop_header_branch
    %11 = sbr.rel (%p9) target = $region8
  $region5: #{static_coefficient_model.1} parent=0 // loop_body
    %s13 = ssub.s32 %s8, 1
    %s14 = ssub.s32 %s8, 2
    %s15 = sadd.s32 %s8, 1
    %s16 = ssub.s32 %s8, %s15
    %p17 = scmp.eq.s32.totalorder %s16, 0
    %s19 = sadd.s32 %s18, 1
    %s20 = scalar_select %p17, %s18, %s19
    %p23 = pneg %p17
    %p24 = scmp.eq.s32.totalorder %s8, 1
    %p25 = por %p23, %p24
    %p26 = scmp.ne.s32.totalorder %s18, %s21
    %p27 = scmp.eq.s32.totalorder %s8, 0
    %p28 = por %p26, %p27
    %p29 = scmp.ne.s32.totalorder %s18, %s21
    %p30 = scmp.eq.s32.totalorder %s13, 1
    %p31 = por %p29, %p30
    %p32 = scmp.ne.s32.totalorder %s21, %s22
    %p33 = scmp.eq.s32.totalorder %s13, 0
    %p34 = por %p32, %p33
    %p35 = scmp.ne.s32.totalorder %s21, %s22
    %p36 = scmp.eq.s32.totalorder %s14, 1
    %p37 = por %p35, %p36
    %p39 = scmp.ne.s32.totalorder %s22, %s38
    %p40 = scmp.eq.s32.totalorder %s14, 0
    %p41 = por %p39, %p40
    %s43 = sadd.s32 %s42, 1
    %p46 = scmp.eq.s32.totalorder %s8, 1
    %p47 = scmp.ne.s32.totalorder %s42, %s44
    %p48 = scmp.eq.s32.totalorder %s8, 0
    %p49 = por %p47, %p48
    %p50 = scmp.ne.s32.totalorder %s42, %s44
    %p51 = scmp.eq.s32.totalorder %s13, 1
    %p52 = por %p50, %p51
    %p53 = scmp.ne.s32.totalorder %s44, %s45
    %p54 = scmp.eq.s32.totalorder %s13, 0
    %p55 = por %p53, %p54
    %p56 = scmp.ne.s32.totalorder %s44, %s45
    %p57 = scmp.eq.s32.totalorder %s14, 1
    %p58 = por %p56, %p57
    %p60 = scmp.ne.s32.totalorder %s45, %s59
    %p61 = scmp.eq.s32.totalorder %s14, 0
    %p62 = por %p60, %p61
    %s63 = ssub.s32 %s8, %s15
    %p64 = scmp.eq.s32.totalorder %s63, 0
    %s66 = sadd.s32 %s65, 1
    %s67 = scalar_select %p64, %s65, %s66
    %p70 = pneg %p64
    %p71 = scmp.eq.s32.totalorder %s8, 1
    %p72 = por %p70, %p71
    %p73 = scmp.ne.s32.totalorder %s65, %s68
    %p74 = scmp.eq.s32.totalorder %s8, 0
    %p75 = por %p73, %p74
    %p76 = scmp.ne.s32.totalorder %s65, %s68
    %p77 = scmp.eq.s32.totalorder %s13, 1
    %p78 = por %p76, %p77
    %p79 = scmp.ne.s32.totalorder %s68, %s69
    %p80 = scmp.eq.s32.totalorder %s13, 0
    %p81 = por %p79, %p80
    %p82 = scmp.ne.s32.totalorder %s68, %s69
    %p83 = scmp.eq.s32.totalorder %s14, 1
    %p84 = por %p82, %p83
    %p86 = scmp.ne.s32.totalorder %s69, %s85
    %p87 = scmp.eq.s32.totalorder %s14, 0
    %p88 = por %p86, %p87
    %p89 = scmp.le.s32.totalorder 1, %s8
    %p90 = scmp.lt.s32.totalorder %s8, 3
    %p91 = pnand %p89, %p90
    %p92 = pneg %p91
    // Predicated region
    $region9: #{static_coefficient_model.1} parent=5 // pred_check
      _
    $region10: #{static_coefficient_model.1} parent=5 // pred_check_branch
      %94 = sbr.rel (%p91) target = $region12
    $region11: #{static_coefficient_model.1} parent=5 // pred_region
      %s95 = ssub.s32 %s8, 1
      // Predicated region
      $region13: #{static_coefficient_model.1} parent=11 // pred_check
        %p96 = pneg %p55
      $region14: #{static_coefficient_model.1} parent=11 // pred_check_branch
        %98 = sbr.rel (%p96) target = $region16
      $region15: #{static_coefficient_model.1} parent=11 // pred_region
        _
      $region16: #{static_coefficient_model.1} parent=11 // pred_fallthru
        _
    $region12: #{static_coefficient_model.1} parent=5 // pred_fallthru
      _
    %p99 = scmp.lt.s32.totalorder %s8, 2
    // Predicated region
    $region17: #{static_coefficient_model.1} parent=5 // pred_check
      %p100 = pneg %p99
    $region18: #{static_coefficient_model.1} parent=5 // pred_check_branch
      %102 = sbr.rel (%p100) target = $region20
    $region19: #{static_coefficient_model.1} parent=5 // pred_region
      // Predicated region
      $region21: #{static_coefficient_model.1} parent=19 // pred_check
        %p103 = pneg %p28
      $region22: #{static_coefficient_model.1} parent=19 // pred_check_branch
        %105 = sbr.rel (%p103) target = $region24
      $region23: #{static_coefficient_model.1} parent=19 // pred_region
        %p106 = scmp.lt.s32.totalorder %s8, 1
        %s107 = scalar_select %p106, %s8, 1
        %s108 = smul.addr %s107, 8
        %s109 = scalar_lea.vmem %s0, %s108
      $region24: #{static_coefficient_model.1} parent=19 // pred_fallthru
        _
    $region20: #{static_coefficient_model.1} parent=5 // pred_fallthru
      _
    %p110 = scmp.le.s32.totalorder 1, %s8
    %p111 = scmp.lt.s32.totalorder %s8, 3
    %p112 = pnand %p110, %p111
    %p113 = pneg %p112
    // Predicated region
    $region25: #{static_coefficient_model.1} parent=5 // pred_check
      _
    $region26: #{static_coefficient_model.1} parent=5 // pred_check_branch
      %115 = sbr.rel (%p112) target = $region28
    $region27: #{static_coefficient_model.1} parent=5 // pred_region
      %s116 = ssub.s32 %s8, 1
      %p117 = scmp.lt.s32.totalorder %s13, 1
      %s118 = scalar_select %p117, %s13, 1
      %s119 = smul.addr %s118, 8
      %s120 = scalar_lea.vmem %s0, %s119
      %p121 = pneg %p34
      %p122 = pneg %p31
      %p123 = pneg %p55
      %p124 = pneg %p52
      %p125 = pneg %p81
      %p126 = pneg %p78
      %p127 = scmp.lt.s32.totalorder %s13, 1
      %s128 = scalar_select %p127, %s13, 1
      %s129 = smul.addr %s128, 8
      %s130 = scalar_lea.vmem %s2, %s129
      %p131 = scmp.lt.s32.totalorder %s13, 1
      %s132 = scalar_select %p131, %s13, 1
      %s133 = smul.addr %s132, 8
      %s134 = scalar_lea.vmem %s0, %s133
      %p135 = scmp.lt.s32.totalorder %s13, 1
      %s136 = scalar_select %p135, %s13, 1
      %s137 = smul.addr %s136, 8
      %s138 = scalar_lea.vmem %s2, %s137
      %v139 = vld [vmem:[%s134] sm:$0xff]
      %v140 = vld [vmem:[%s1] sm:$0xff]
      %v141 = vld [vmem:[%s1 + $0x8] sm:$0xff]
      %v142 = vld [vmem:[%s1 + $0x10] sm:$0xff]
      %v143 = vld [vmem:[%s1 + $0x18] sm:$0xff]
      %v144 = vld [vmem:[%s1 + $0x20] sm:$0xff]
      %v145 = vld [vmem:[%s1 + $0x28] sm:$0xff]
      %v146 = vld [vmem:[%s1 + $0x30] sm:$0xff]
      %v147 = vld [vmem:[%s1 + $0x38] sm:$0xff]
      %v148 = vld [vmem:[%s1 + $0x40] sm:$0xff]
      %v149 = vld [vmem:[%s1 + $0x48] sm:$0xff]
      %v150 = vld [vmem:[%s1 + $0x50] sm:$0xff]
      %v151 = vld [vmem:[%s1 + $0x58] sm:$0xff]
      %v152 = vld [vmem:[%s1 + $0x60] sm:$0xff]
      %v153 = vld [vmem:[%s1 + $0x68] sm:$0xff]
      %v154 = vld [vmem:[%s1 + $0x70] sm:$0xff]
      %v155 = vld [vmem:[%s1 + $0x78] sm:$0xff]
      %156 = vmatprep.subr.mxu0 0.0
      %157 = vmatpush1.msra.mxu0 %v140
      %158 = vmatprep.subr.mxu0 0.0
      %159 = vmatpush1.msra.mxu0 %v141
      %160 = vmatprep.subr.mxu0 0.0
      %161 = vmatpush1.msra.mxu0 %v142
      %162 = vmatprep.subr.mxu0 0.0
      %163 = vmatpush1.msra.mxu0 %v143
      %164 = vmatprep.subr.mxu0 0.0
      %165 = vmatpush1.msra.mxu0 %v144
      %166 = vmatprep.subr.mxu0 0.0
      %167 = vmatpush1.msra.mxu0 %v145
      %168 = vmatprep.subr.mxu0 0.0
      %169 = vmatpush1.msra.mxu0 %v146
      %170 = vmatprep.subr.mxu0 0.0
      %171 = vmatpush1.msra.mxu0 %v147
      %172 = vmatprep.subr.mxu0 0.0
      %173 = vmatpush1.msra.mxu0 %v148
      %174 = vmatprep.subr.mxu0 0.0
      %175 = vmatpush1.msra.mxu0 %v149
      %176 = vmatprep.subr.mxu0 0.0
      %177 = vmatpush1.msra.mxu0 %v150
      %178 = vmatprep.subr.mxu0 0.0
      %179 = vmatpush1.msra.mxu0 %v151
      %180 = vmatprep.subr.mxu0 0.0
      %181 = vmatpush1.msra.mxu0 %v152
      %182 = vmatprep.subr.mxu0 0.0
      %183 = vmatpush1.msra.mxu0 %v153
      %184 = vmatprep.subr.mxu0 0.0
      %185 = vmatpush1.msra.mxu0 %v154
      %186 = vmatprep.subr.mxu0 0.0
      %187 = vmatpush1.msra.mxu0 %v155
      %188 = vmatprep.subr.mxu0 0.0
      %189 = vmatpush1.msra.mxu0 0.0
      %190 = vmatprep.subr.mxu0 0.0
      %191 = vmatpush1.msra.mxu0 0.0
      %192 = vmatprep.subr.mxu0 0.0
      %193 = vmatpush1.msra.mxu0 0.0
      %194 = vmatprep.subr.mxu0 0.0
      %195 = vmatpush1.msra.mxu0 0.0
      %196 = vmatprep.subr.mxu0 0.0
      %197 = vmatpush1.msra.mxu0 0.0
      %198 = vmatprep.subr.mxu0 0.0
      %199 = vmatpush1.msra.mxu0 0.0
      %200 = vmatprep.subr.mxu0 0.0
      %201 = vmatpush1.msra.mxu0 0.0
      %202 = vmatprep.subr.mxu0 0.0
      %203 = vmatpush1.msra.mxu0 0.0
      %204 = vmatprep.subr.mxu0 0.0
      %205 = vmatpush1.msra.mxu0 0.0
      %206 = vmatprep.subr.mxu0 0.0
      %207 = vmatpush1.msra.mxu0 0.0
      %208 = vmatprep.subr.mxu0 0.0
      %209 = vmatpush1.msra.mxu0 0.0
      %210 = vmatprep.subr.mxu0 0.0
      %211 = vmatpush1.msra.mxu0 0.0
      %212 = vmatprep.subr.mxu0 0.0
      %213 = vmatpush1.msra.mxu0 0.0
      %214 = vmatprep.subr.mxu0 0.0
      %215 = vmatpush1.msra.mxu0 0.0
      %216 = vmatprep.subr.mxu0 0.0
      %217 = vmatpush1.msra.mxu0 0.0
      %218 = vmatprep.subr.mxu0 0.0
      %219 = vmatpush1.msra.mxu0 0.0
      %220 = vmatprep.mubr.f32.mxu0 0.0
      %221 = vmatmul.mubr.f32.gmra.mrb[0].mxu0 %v139
      %v222 = vpop.f32.mrb[0].mxu0
      %v223 = vadd.f32 0.0, %v222
      %v224 = vpop.f32.mrb[0].mxu0
      %225 = vdwg.mxu0
      %vm226 = vcmask 261120
      %227 = vst.msk [vmem:[%s138] sm:$0xff] %vm226, %v223
      %p228 = scmp.lt.s32.totalorder %s13, 1
      %s229 = scalar_select %p228, %s13, 1
      %s230 = smul.addr %s229, 8
      %s231 = scalar_lea.vmem %s2, %s230
      // Predicated region
      $region29: #{static_coefficient_model.1} parent=27 // pred_check
        %p232 = pneg %p78
      $region30: #{static_coefficient_model.1} parent=27 // pred_check_branch
        %234 = sbr.rel (%p232) target = $region32
      $region31: #{static_coefficient_model.1} parent=27 // pred_region
        _
      $region32: #{static_coefficient_model.1} parent=27 // pred_fallthru
        _
    $region28: #{static_coefficient_model.1} parent=5 // pred_fallthru
      _
    %p235 = scmp.le.s32.totalorder 2, %s8
    // Predicated region
    $region33: #{static_coefficient_model.1} parent=5 // pred_check
      %p236 = pneg %p235
    $region34: #{static_coefficient_model.1} parent=5 // pred_check_branch
      %238 = sbr.rel (%p236) target = $region36
    $region35: #{static_coefficient_model.1} parent=5 // pred_region
      %s239 = ssub.s32 %s8, 2
      // Predicated region
      $region37: #{static_coefficient_model.1} parent=35 // pred_check
        %p240 = pneg %p84
      $region38: #{static_coefficient_model.1} parent=35 // pred_check_branch
        %242 = sbr.rel (%p240) target = $region40
      $region39: #{static_coefficient_model.1} parent=35 // pred_region
        %p243 = scmp.lt.s32.totalorder %s14, 1
        %s244 = scalar_select %p243, %s14, 1
        %s245 = smul.addr %s244, 8
        %s246 = scalar_lea.vmem %s2, %s245
      $region40: #{static_coefficient_model.1} parent=35 // pred_fallthru
        _
    $region36: #{static_coefficient_model.1} parent=5 // pred_fallthru
      _
  $region6: #{static_coefficient_model.1} parent=0 // loop_footer
    %s12 = sadd.s32 1, %s8
  $region7: #{static_coefficient_model.1} parent=0 // loop_footer_branch
    %7 = sbr.rel target = $region3
  $region8: #{static_coefficient_model.1} parent=0 // loop_exit
    _

</llo_original>
